<compile_context>
chip_gen: v7x
topology: tpu7x:2x2x1
jax: 0.10.0
libtpu: 0.0.40
codegen_flags: <defaults>
</compile_context>

<pallas_src>
import functools

import jax
import jax.numpy as jnp
from jax import lax
from jax.experimental import pallas as pl
from jax.experimental.pallas import tpu as pltpu

EPS = 1e-5


def _bn_dropout_kernel(drop_p, use_hw_prng, d_total,
                       seed_ref, x_ref, gamma_ref, beta_ref, o_ref):
    b = x_ref.shape[0]
    inv_b = 1.0 / float(b)

    # ---- Pass 1: per-feature batch mean ------------------------------------
    mean = jnp.sum(x_ref[...].astype(jnp.float32), axis=0, keepdims=True) * inv_b

    # ---- Pass 2: centered (numerically stable) biased variance -------------
    diff = x_ref[...].astype(jnp.float32) - mean               # (B, TILE_D)
    var = jnp.sum(diff * diff, axis=0, keepdims=True) * inv_b
    inv_std = lax.rsqrt(var + EPS)

    # Fold gamma, beta and the dropout 1/(1-p) into one per-feature scale/shift.
    keep_scale = 1.0 / (1.0 - drop_p) if drop_p > 0.0 else 1.0
    g_inv = gamma_ref[...] * inv_std                            # (1, TILE_D)
    scale = g_inv * keep_scale
    shift = (beta_ref[...] - mean * g_inv) * keep_scale

    # ---- Pass 3: normalize (re-read x from VMEM; cheap vld, frees vregs) ---
    y = x_ref[...].astype(jnp.float32) * scale + shift          # mul + add / elem

    # ---- Dropout ------------------------------------------------------------
    if drop_p > 0.0:
        # keep iff uniform u32 >= p * 2^32  (keep prob = 1 - p)
        threshold = jnp.uint32(min(int(drop_p * 4294967296.0), 4294967295))
        if use_hw_prng:
            # Hardware PRNG: per-tile stream keyed on (seed, grid index).
            pltpu.prng_seed(seed_ref[0], pl.program_id(0))
            bits = pltpu.bitcast(pltpu.prng_random_bits(y.shape), jnp.uint32)
        else:
            # Fallback (interpret / non-TPU): trimmed 2-round integer hash of
            # (seed, global element index).
            tile_d = y.shape[1]
            col_base = pl.program_id(0) * tile_d
            rows = lax.broadcasted_iota(jnp.int32, y.shape, 0)
            cols = lax.broadcasted_iota(jnp.int32, y.shape, 1) + col_base
            idx = (rows * d_total + cols).astype(jnp.uint32)
            h = (idx + seed_ref[0].astype(jnp.uint32) * jnp.uint32(0x85EBCA77)) \
                * jnp.uint32(0x9E3779B1)
            h = (h ^ (h >> 16)) * jnp.uint32(0x7FEB352D)
            bits = h ^ (h >> 15)
        y = jnp.where(bits >= threshold, y, 0.0)

    o_ref[...] = y.astype(o_ref.dtype)


def bn_dropout(x, gamma, beta, seed, *, drop_p=0.1, tile_d=None,
               vmem_budget_bytes=None, use_hw_prng=None):
    """x: (B, D) float; gamma/beta: (D,); seed: python int; 0 <= drop_p < 1."""
    B, D = x.shape
    assert 0.0 <= drop_p < 1.0, "drop_p must be in [0, 1)"

    if use_hw_prng is None:
        use_hw_prng = jax.default_backend() == "tpu"
    if not use_hw_prng:
        # Hash fallback indexes elements as rows*D + cols in int32.
        assert B * D < 2**31, "hash-PRNG fallback needs B*D < 2^31"

    # ---- Tile policy ---------------------------------------------------------
    # Budget for the double-buffered f32 input + output tiles.  24 MiB is safe
    # on all generations (v5e/v6e: 128 MiB physical; v7x: 64 MiB physical).
    if vmem_budget_bytes is None:
        vmem_budget_bytes = 24 * 1024 * 1024
    itemsize = 4  # compute / staging is f32
    max_tile_by_vmem = max(128, (vmem_budget_bytes // (4 * B * itemsize)) // 128 * 128)

    if tile_d is None:
        candidates = [c for c in range(128, D + 1, 128) if D % c == 0]
        if not candidates:
            # D has no 128-multiple divisor: single (masked) tile over features.
            tile_d = D
        else:
            # Largest lane-dense tile that fits VMEM AND leaves >= 2 grid steps
            # (so v7x's two TensorCores both get work) whenever D allows it.
            min_steps = 2 if D >= 256 else 1
            fitting = [c for c in candidates
                       if c <= max_tile_by_vmem and D // c >= min_steps]
            tile_d = max(fitting) if fitting else min(candidates)
    assert D % tile_d == 0
    grid = (D // tile_d,)

    # Explicit VMEM limit derived from the chosen tile (double-buffered in/out
    # + param tiles + slack), capped so it never exceeds v7x physical headroom.
    tile_bytes = B * tile_d * itemsize
    param_bytes = 2 * tile_d * itemsize
    needed = 2 * (2 * tile_bytes + 2 * param_bytes) + (1 << 20)
    vmem_limit = int(min(max(needed, 16 * 1024 * 1024), 32 * 1024 * 1024))

    gamma2 = gamma.reshape(1, D).astype(jnp.float32)
    beta2 = beta.reshape(1, D).astype(jnp.float32)
    seed_arr = jnp.asarray([seed], dtype=jnp.int32)

    kernel = functools.partial(_bn_dropout_kernel, float(drop_p),
                               bool(use_hw_prng), int(D))

    cost = pl.CostEstimate(
        flops=8 * B * D,                  # stats + normalize + dropout select
        transcendentals=D,                # rsqrt per feature
        bytes_accessed=2 * B * D * x.dtype.itemsize + 8 * D,
    )

    return pl.pallas_call(
        kernel,
        out_shape=jax.ShapeDtypeStruct((B, D), x.dtype),
        grid_spec=pltpu.PrefetchScalarGridSpec(
            num_scalar_prefetch=1,
            grid=grid,
            in_specs=[
                pl.BlockSpec((B, tile_d), lambda j, seed_ref: (0, j)),
                pl.BlockSpec((1, tile_d), lambda j, seed_ref: (0, j)),
                pl.BlockSpec((1, tile_d), lambda j, seed_ref: (0, j)),
            ],
            out_specs=pl.BlockSpec((B, tile_d), lambda j, seed_ref: (0, j)),
        ),
        compiler_params=pltpu.CompilerParams(
            dimension_semantics=("parallel",),   # v7x: shard D-tiles over 2 TCs
            vmem_limit_bytes=vmem_limit,
        ),
        cost_estimate=cost,
    )(seed_arr, x, gamma2, beta2)


if __name__ == "__main__":
    key = jax.random.PRNGKey(0)
    B, D = 8, 256            # small batch of sentence embeddings, embedding_dim=256
    drop_p = 0.1

    x = jax.random.normal(key, (B, D), dtype=jnp.float32)

    # BN parameters (PyTorch default init is weight=1, bias=0; perturb slightly
    # so the affine path is actually exercised).
    gamma = 1.0 + 0.01 * jnp.arange(D, dtype=jnp.float32)
    beta = 0.05 * jnp.sin(jnp.arange(D, dtype=jnp.float32))

    # Pure-JAX reference for the BatchNorm part (biased variance, training mode).
    mean = jnp.mean(x, axis=0, keepdims=True)
    var = jnp.mean(jnp.square(x - mean), axis=0, keepdims=True)
    ref_bn = (x - mean) * lax.rsqrt(var + EPS) * gamma[None, :] + beta[None, :]

    # 1) No-dropout path must match the BN reference elementwise.
    out_nodrop = jax.block_until_ready(bn_dropout(x, gamma, beta, seed=0, drop_p=0.0))
    assert out_nodrop.shape == (B, D)
    assert bool(jnp.all(jnp.abs(out_nodrop - ref_bn) < 2e-3))

    # 2) Dropout path: kept elements equal ref / (1-p); drop rate ~ p.
    out = jax.block_until_ready(bn_dropout(x, gamma, beta, seed=1234, drop_p=drop_p))
    ref_scaled = ref_bn / (1.0 - drop_p)
    kept = out != 0.0
    assert out.shape == (B, D)
    assert bool(jnp.all(jnp.isfinite(out)))
    assert bool(jnp.all(jnp.where(kept, jnp.abs(out - ref_scaled) < 2e-3, True)))
    drop_frac = 1.0 - float(jnp.mean(kept.astype(jnp.float32)))
    assert 0.0 < drop_frac < 0.3   # roughly p=0.1 dropped

    print("KERNEL_OK")
</pallas_src>

<mosaic_0001>
module attributes {stable_mosaic.version = 11 : i64} {
  func.func @_bn_dropout_kernel(%arg0: i32, %arg1: memref<1xi32, #tpu.memory_space<smem>>, %arg2: memref<8x128xf32, #tpu.memory_space<vmem>>, %arg3: memref<1x128xf32, #tpu.memory_space<vmem>>, %arg4: memref<1x128xf32, #tpu.memory_space<vmem>>, %arg5: memref<8x128xf32, #tpu.memory_space<vmem>>) attributes {dimension_semantics = [#tpu.dimension_semantics<parallel>], iteration_bounds = array<i64: 2>, scalar_prefetch = 1 : i64, scratch_operands = 0 : i64, tpu.core_type = #tpu.core_type<tc>, window_params = [{transform_indices = @transform_0, window_bounds = array<i64: 8, 128>}, {transform_indices = @transform_1, window_bounds = array<i64: 1, 128>}, {transform_indices = @transform_2, window_bounds = array<i64: 1, 128>}, {transform_indices = @transform_3, window_bounds = array<i64: 8, 128>}]} {
    %c0 = arith.constant 0 : index
    %c0_0 = arith.constant 0 : index
    %0 = vector.load %arg2[%c0, %c0_0] : memref<8x128xf32, #tpu.memory_space<vmem>>, vector<8x128xf32>
    %cst = arith.constant dense<0.000000e+00> : vector<128xf32>
    %1 = vector.multi_reduction <add>, %0, %cst [0] : vector<8x128xf32> to vector<128xf32>
    %2 = vector.shape_cast %1 : vector<128xf32> to vector<1x128xf32>
    %cst_1 = arith.constant 1.250000e-01 : f32
    %3 = vector.broadcast %cst_1 : f32 to vector<1x128xf32>
    %4 = arith.mulf %2, %3 : vector<1x128xf32>
    %c0_2 = arith.constant 0 : index
    %c0_3 = arith.constant 0 : index
    %5 = vector.load %arg2[%c0_2, %c0_3] : memref<8x128xf32, #tpu.memory_space<vmem>>, vector<8x128xf32>
    %6 = vector.broadcast %4 : vector<1x128xf32> to vector<8x128xf32>
    %7 = arith.subf %5, %6 : vector<8x128xf32>
    %8 = arith.mulf %7, %7 : vector<8x128xf32>
    %cst_4 = arith.constant dense<0.000000e+00> : vector<128xf32>
    %9 = vector.multi_reduction <add>, %8, %cst_4 [0] : vector<8x128xf32> to vector<128xf32>
    %10 = vector.shape_cast %9 : vector<128xf32> to vector<1x128xf32>
    %cst_5 = arith.constant 1.250000e-01 : f32
    %11 = vector.broadcast %cst_5 : f32 to vector<1x128xf32>
    %12 = arith.mulf %10, %11 : vector<1x128xf32>
    %cst_6 = arith.constant 9.99999974E-6 : f32
    %13 = vector.broadcast %cst_6 : f32 to vector<1x128xf32>
    %14 = arith.addf %12, %13 : vector<1x128xf32>
    %15 = math.rsqrt %14 : vector<1x128xf32>
    %c0_7 = arith.constant 0 : index
    %c0_8 = arith.constant 0 : index
    %16 = vector.load %arg3[%c0_7, %c0_8] : memref<1x128xf32, #tpu.memory_space<vmem>>, vector<1x128xf32>
    %17 = arith.mulf %16, %15 : vector<1x128xf32>
    %cst_9 = arith.constant 1.000000e+00 : f32
    %18 = vector.broadcast %cst_9 : f32 to vector<1x128xf32>
    %19 = arith.mulf %17, %18 : vector<1x128xf32>
    %c0_10 = arith.constant 0 : index
    %c0_11 = arith.constant 0 : index
    %20 = vector.load %arg4[%c0_10, %c0_11] : memref<1x128xf32, #tpu.memory_space<vmem>>, vector<1x128xf32>
    %21 = arith.mulf %4, %17 : vector<1x128xf32>
    %22 = arith.subf %20, %21 : vector<1x128xf32>
    %cst_12 = arith.constant 1.000000e+00 : f32
    %23 = vector.broadcast %cst_12 : f32 to vector<1x128xf32>
    %24 = arith.mulf %22, %23 : vector<1x128xf32>
    %c0_13 = arith.constant 0 : index
    %c0_14 = arith.constant 0 : index
    %25 = vector.load %arg2[%c0_13, %c0_14] : memref<8x128xf32, #tpu.memory_space<vmem>>, vector<8x128xf32>
    %26 = vector.broadcast %19 : vector<1x128xf32> to vector<8x128xf32>
    %27 = arith.mulf %25, %26 : vector<8x128xf32>
    %28 = vector.broadcast %24 : vector<1x128xf32> to vector<8x128xf32>
    %29 = arith.addf %27, %28 : vector<8x128xf32>
    %c0_15 = arith.constant 0 : index
    %c0_16 = arith.constant 0 : index
    %30 = vector.load %arg5[%c0_15, %c0_16] : memref<8x128xf32, #tpu.memory_space<vmem>>, vector<8x128xf32>
    tpu.vector_store %arg5[%c0_15, %c0_16], %29 {strides = array<i32>} : memref<8x128xf32, #tpu.memory_space<vmem>>, vector<8x128xf32>,
    return
  }
  func.func @transform_0(%arg0: i32, %arg1: memref<1xi32, #tpu.memory_space<smem>>) -> (i32, i32) {
    %c0_i32 = arith.constant 0 : i32
    %c0_i32_0 = arith.constant 0 : i32
    return %c0_i32, %arg0 : i32, i32
  }
  func.func @transform_1(%arg0: i32, %arg1: memref<1xi32, #tpu.memory_space<smem>>) -> (i32, i32) {
    %c0_i32 = arith.constant 0 : i32
    %c0_i32_0 = arith.constant 0 : i32
    return %c0_i32, %arg0 : i32, i32
  }
  func.func @transform_2(%arg0: i32, %arg1: memref<1xi32, #tpu.memory_space<smem>>) -> (i32, i32) {
    %c0_i32 = arith.constant 0 : i32
    %c0_i32_0 = arith.constant 0 : i32
    return %c0_i32, %arg0 : i32, i32
  }
  func.func @transform_3(%arg0: i32, %arg1: memref<1xi32, #tpu.memory_space<smem>>) -> (i32, i32) {
    %c0_i32 = arith.constant 0 : i32
    %c0_i32_0 = arith.constant 0 : i32
    return %c0_i32, %arg0 : i32, i32
  }
}

</mosaic_0001>

<llo_original>
// kernel: tpu_custom_call.1
$region0: #{tpu_custom_call.1}
  #allocation0 [shape = 'u32[]', space=smem, size = 0x4, offset = 0x4, fixed_abs, tag = 'smem constant byte address 0x4 - core index']
  #allocation1 [shape = 'u32[144,128]{1,0:T(1,128)}', space=vmem, size = 0x12000, scoped, tag = 'internal scratch']
  #allocation2 [shape = 's32[1]{0}', space=sflag, size = 0x4, scoped, tag = 'scoped memory for tpu_custom_call.1']
  #allocation3 [shape = 's32[1]{0:T(128)S(6)}', space=smem, size = 0x200, scoped, tag = 'prefetched SMEM operand 0']
  %s0 = inlined_call_operand.<no memory space> [shape: s32[1], index: 0, kind: input, shape index: {}]
  %s1 = inlined_call_operand.hbm [shape: f32[8,256], index: 1, kind: input, shape index: {}]
  %s2 = inlined_call_operand.vmem [shape: f32[1,256], index: 2, kind: input, shape index: {}]
  %s3 = inlined_call_operand.vmem [shape: f32[1,256], index: 3, kind: input, shape index: {}]
  %s4 = inlined_call_operand.hbm [shape: f32[8,256], index: 4, kind: output, shape index: {}]
  %s5 = sld [smem:[#allocation0]]
  $region49: #{tpu_custom_call.1} parent=0
    _
  %s7 = ssub.s32 1, %s5
  %s8 = scalar_select 0, %s7, %s5
  %9 = sst [smem:[#allocation3]] %s0
  $region1: #{tpu_custom_call.1} parent=0
    #allocation4 [shape = 'u8[8192]{0}', space=vmem, size = 0x2000, scoped, tag = 'input window, operand 1']
    #allocation5 [shape = 's32[2]{0}', space=sflag, size = 0x8, scoped, tag = 'scoped memory for tpu_custom_call.1']
    #allocation6 [shape = 's32[2]{0}', space=sflag, size = 0x8, scoped, tag = 'scoped memory for tpu_custom_call.1']
    #allocation7 [shape = 'u8[8192]{0}', space=vmem, size = 0x2000, scoped, tag = 'output window, operand 0']
    %10 = vsyncpa [#allocation5], 0
    %s11 = scalar_lea.sflag [#allocation5], 1
    %12 = vsyncpa %s11, 0
    %13 = vsyncpa [#allocation6], 0
    %s14 = scalar_lea.sflag [#allocation6], 1
    %15 = vsyncpa %s14, 0
    loop: start=0, step=1, limit=4
    $region2: #{tpu_custom_call.1} parent=1 // loop_pre_header
      _
    $region3: #{tpu_custom_call.1} parent=1 // loop_header
      %s17 = sphi 0, %s21
      %p18 = scmp.ge.s32.totalorder %s17, 4
      %s27 = sphi 0, %s29
      %s30 = sphi 0, %s27
      %s31 = sphi 0, %s30
      %s47 = sphi 0, %s31
      %s53 = sphi 0, %s55
      %s56 = sphi 0, %s53
      %s57 = sphi 0, %s56
      %s73 = sphi 0, %s57
      %s79 = sphi 0, %s81
      %s82 = sphi 0, %s79
      %s83 = sphi 0, %s82
      %s99 = sphi 0, %s83
      %s105 = sphi 0, %s107
      %s108 = sphi 0, %s105
      %s109 = sphi 0, %s108
      %s125 = sphi 0, %s109
    $region4: #{tpu_custom_call.1} parent=1 // loop_header_branch
      %20 = sbr.rel (%p18) target = $region8
    $region5: #{tpu_custom_call.1} parent=1 // loop_body
      %s22 = ssub.s32 %s17, 1
      %s23 = ssub.s32 %s17, 2
      %s24 = sadd.s32 %s17, 1
      %s25 = ssub.s32 %s17, %s24
      %p26 = scmp.eq.s32.totalorder %s25, 0
      %s28 = sadd.s32 %s27, 1
      %s29 = scalar_select %p26, %s27, %s28
      %p32 = pneg %p26
      %p33 = scmp.eq.s32.totalorder %s17, 1
      %p34 = por %p32, %p33
      %p35 = scmp.ne.s32.totalorder %s27, %s30
      %p36 = scmp.eq.s32.totalorder %s17, 0
      %p37 = por %p35, %p36
      %p38 = scmp.ne.s32.totalorder %s27, %s30
      %p39 = scmp.eq.s32.totalorder %s22, 1
      %p40 = por %p38, %p39
      %p41 = scmp.ne.s32.totalorder %s30, %s31
      %p42 = scmp.eq.s32.totalorder %s22, 0
      %p43 = por %p41, %p42
      %p44 = scmp.ne.s32.totalorder %s30, %s31
      %p45 = scmp.eq.s32.totalorder %s23, 1
      %p46 = por %p44, %p45
      %p48 = scmp.ne.s32.totalorder %s31, %s47
      %p49 = scmp.eq.s32.totalorder %s23, 0
      %p50 = por %p48, %p49
      %s51 = ssub.s32 %s17, %s24
      %p52 = scmp.eq.s32.totalorder %s51, 0
      %s54 = sadd.s32 %s53, 1
      %s55 = scalar_select %p52, %s53, %s54
      %p58 = pneg %p52
      %p59 = scmp.eq.s32.totalorder %s17, 1
      %p60 = por %p58, %p59
      %p61 = scmp.ne.s32.totalorder %s53, %s56
      %p62 = scmp.eq.s32.totalorder %s17, 0
      %p63 = por %p61, %p62
      %p64 = scmp.ne.s32.totalorder %s53, %s56
      %p65 = scmp.eq.s32.totalorder %s22, 1
      %p66 = por %p64, %p65
      %p67 = scmp.ne.s32.totalorder %s56, %s57
      %p68 = scmp.eq.s32.totalorder %s22, 0
      %p69 = por %p67, %p68
      %p70 = scmp.ne.s32.totalorder %s56, %s57
      %p71 = scmp.eq.s32.totalorder %s23, 1
      %p72 = por %p70, %p71
      %p74 = scmp.ne.s32.totalorder %s57, %s73
      %p75 = scmp.eq.s32.totalorder %s23, 0
      %p76 = por %p74, %p75
      %s77 = ssub.s32 %s17, %s24
      %p78 = scmp.eq.s32.totalorder %s77, 0
      %s80 = sadd.s32 %s79, 1
      %s81 = scalar_select %p78, %s79, %s80
      %p84 = pneg %p78
      %p85 = scmp.eq.s32.totalorder %s17, 1
      %p86 = por %p84, %p85
      %p87 = scmp.ne.s32.totalorder %s79, %s82
      %p88 = scmp.eq.s32.totalorder %s17, 0
      %p89 = por %p87, %p88
      %p90 = scmp.ne.s32.totalorder %s79, %s82
      %p91 = scmp.eq.s32.totalorder %s22, 1
      %p92 = por %p90, %p91
      %p93 = scmp.ne.s32.totalorder %s82, %s83
      %p94 = scmp.eq.s32.totalorder %s22, 0
      %p95 = por %p93, %p94
      %p96 = scmp.ne.s32.totalorder %s82, %s83
      %p97 = scmp.eq.s32.totalorder %s23, 1
      %p98 = por %p96, %p97
      %p100 = scmp.ne.s32.totalorder %s83, %s99
      %p101 = scmp.eq.s32.totalorder %s23, 0
      %p102 = por %p100, %p101
      %s103 = ssub.s32 %s17, %s24
      %p104 = scmp.eq.s32.totalorder %s103, 0
      %s106 = sadd.s32 %s105, 1
      %s107 = scalar_select %p104, %s105, %s106
      %p110 = pneg %p104
      %p111 = scmp.eq.s32.totalorder %s17, 1
      %p112 = por %p110, %p111
      %p113 = scmp.ne.s32.totalorder %s105, %s108
      %p114 = scmp.eq.s32.totalorder %s17, 0
      %p115 = por %p113, %p114
      %p116 = scmp.ne.s32.totalorder %s105, %s108
      %p117 = scmp.eq.s32.totalorder %s22, 1
      %p118 = por %p116, %p117
      %p119 = scmp.ne.s32.totalorder %s108, %s109
      %p120 = scmp.eq.s32.totalorder %s22, 0
      %p121 = por %p119, %p120
      %p122 = scmp.ne.s32.totalorder %s108, %s109
      %p123 = scmp.eq.s32.totalorder %s23, 1
      %p124 = por %p122, %p123
      %p126 = scmp.ne.s32.totalorder %s109, %s125
      %p127 = scmp.eq.s32.totalorder %s23, 0
      %p128 = por %p126, %p127
      %p129 = scmp.le.s32.totalorder 1, %s17
      %p130 = scmp.lt.s32.totalorder %s17, 3
      %p131 = pnand %p129, %p130
      %p132 = pneg %p131
      // Predicated region
      $region9: #{tpu_custom_call.1} parent=5 // pred_check
        _
      $region10: #{tpu_custom_call.1} parent=5 // pred_check_branch
        %134 = sbr.rel (%p131) target = $region12
      $region11: #{tpu_custom_call.1} parent=5 // pred_region
        %s135 = ssub.s32 %s17, 1
      $region12: #{tpu_custom_call.1} parent=5 // pred_fallthru
        _
      %p136 = scmp.lt.s32.totalorder %s17, 2
      // Predicated region
      $region13: #{tpu_custom_call.1} parent=5 // pred_check
        %p137 = pneg %p136
      $region14: #{tpu_custom_call.1} parent=5 // pred_check_branch
        %139 = sbr.rel (%p137) target = $region16
      $region15: #{tpu_custom_call.1} parent=5 // pred_region
        // Predicated region
        $region17: #{tpu_custom_call.1} parent=15 // pred_check
          %p140 = pneg %p37
        $region18: #{tpu_custom_call.1} parent=15 // pred_check_branch
          %142 = sbr.rel (%p140) target = $region20
        $region19: #{tpu_custom_call.1} parent=15 // pred_region
          %s143 = sand.u32 %s27, 1
          %s144 = scalar_lea.sflag [#allocation5], %s143
          %s145 = sand.u32 %s27, 1
          %s146 = smul.addr %s145, 8
          %s147 = scalar_lea.vmem [#allocation4], %s146
          %s149 = ssub.s32 128, 128
          %150 = vsyncadd %s144, %s149
          %s151 = smul.addr %s17, 128
          %s152 = scalar_lea.hbm %s1, %s151
          %s154 = sshll.u32 %s147, 4
          %s155 = int_to_ptr.vmem [resolvable:$true] %s154
          %157 = dma.hbm_to_vmem [thread:$0]  %s152, 128, %s155, %s144
        $region20: #{tpu_custom_call.1} parent=15 // pred_fallthru
          _
        // Predicated region
        $region21: #{tpu_custom_call.1} parent=15 // pred_check
          %p158 = pneg %p63
        $region22: #{tpu_custom_call.1} parent=15 // pred_check_branch
          %160 = sbr.rel (%p158) target = $region24
        $region23: #{tpu_custom_call.1} parent=15 // pred_region
          %p161 = scmp.lt.s32.totalorder %s17, 1
          %s162 = scalar_select %p161, %s17, 1
          %s163 = scalar_lea.vmem %s2, %s162
        $region24: #{tpu_custom_call.1} parent=15 // pred_fallthru
          _
        // Predicated region
        $region25: #{tpu_custom_call.1} parent=15 // pred_check
          %p164 = pneg %p89
        $region26: #{tpu_custom_call.1} parent=15 // pred_check_branch
          %166 = sbr.rel (%p164) target = $region28
        $region27: #{tpu_custom_call.1} parent=15 // pred_region
          %p167 = scmp.lt.s32.totalorder %s17, 1
          %s168 = scalar_select %p167, %s17, 1
          %s169 = scalar_lea.vmem %s3, %s168
        $region28: #{tpu_custom_call.1} parent=15 // pred_fallthru
          _
      $region16: #{tpu_custom_call.1} parent=5 // pred_fallthru
        _
      %p170 = scmp.le.s32.totalorder 1, %s17
      %p171 = scmp.lt.s32.totalorder %s17, 3
      %p172 = pnand %p170, %p171
      %p173 = pneg %p172
      // Predicated region
      $region29: #{tpu_custom_call.1} parent=5 // pred_check
        _
      $region30: #{tpu_custom_call.1} parent=5 // pred_check_branch
        %175 = sbr.rel (%p172) target = $region32
      $region31: #{tpu_custom_call.1} parent=5 // pred_region
        %s176 = ssub.s32 %s17, 1
        %s177 = sand.u32 %s30, 1
        %s178 = scalar_lea.sflag [#allocation5], %s177
        %s179 = sand.u32 %s30, 1
        %s180 = smul.addr %s179, 8
        %s181 = scalar_lea.vmem [#allocation4], %s180
        // Predicated region
        $region33: #{tpu_custom_call.1} parent=31 // pred_check
          %p182 = pneg %p43
        $region34: #{tpu_custom_call.1} parent=31 // pred_check_branch
          %184 = sbr.rel (%p182) target = $region36
        $region35: #{tpu_custom_call.1} parent=31 // pred_region
          %185 = dma.done %s178, 128
        $region36: #{tpu_custom_call.1} parent=31 // pred_fallthru
          _
        %s186 = sand.u32 %s30, 1
        %s187 = scalar_lea.sflag [#allocation5], %s186
        %s188 = sand.u32 %s30, 1
        %s189 = smul.addr %s188, 8
        %s190 = scalar_lea.vmem [#allocation4], %s189
        %p191 = pneg %p43
        %p192 = pneg %p40
        %p193 = scmp.lt.s32.totalorder %s22, 1
        %s194 = scalar_select %p193, %s22, 1
        %s195 = scalar_lea.vmem %s2, %s194
        %p196 = pneg %p69
        %p197 = pneg %p66
        %p198 = scmp.lt.s32.totalorder %s22, 1
        %s199 = scalar_select %p198, %s22, 1
        %s200 = scalar_lea.vmem %s3, %s199
        %p201 = pneg %p95
        %p202 = pneg %p92
        %p203 = pneg %p121
        %p204 = pneg %p118
        %s205 = sand.u32 %s108, 1
        %s206 = scalar_lea.sflag [#allocation6], %s205
        %s207 = sand.u32 %s108, 1
        %s208 = smul.addr %s207, 8
        %s209 = scalar_lea.vmem [#allocation7], %s208
        %p210 = scmp.lt.s32.totalorder %s22, 1
        %s211 = scalar_select %p210, %s22, 1
        %s212 = scalar_lea.vmem %s2, %s211
        %p213 = scmp.lt.s32.totalorder %s22, 1
        %s214 = scalar_select %p213, %s22, 1
        %s215 = scalar_lea.vmem %s3, %s214
        %v216 = vld [vmem:[%s181] sm:$0xff]
        %v217 = vrot.slane %v216, 4
        %v218 = vadd.f32 %v216, %v217
        %v219 = vrot.slane %v218, 2
        %v220 = vadd.f32 %v218, %v219
        %v221 = vrot.slane %v220, 1
        %v222 = vadd.f32 %v220, %v221
        %v223 = vmul.f32 %v222, 0.125
        %v224 = vsub.f32 %v216, %v223
        %v225 = vmul.f32 %v224, %v224
        %v226 = vrot.slane %v225, 4
        %v227 = vadd.f32 %v225, %v226
        %v228 = vrot.slane %v227, 2
        %v229 = vadd.f32 %v227, %v228
        %v230 = vrot.slane %v229, 1
        %v231 = vadd.f32 %v229, %v230
        %v232 = vmul.f32 %v231, 0.125
        %v233 = vadd.f32 %v232, 1e-05
        %v234 = vrsqrt.pop %v233
        %v235 = vld [vmem:[%s212] sm:$0x1]
        %v236 = vmul.f32 %v235, %v234
        %v237 = vld [vmem:[%s215] sm:$0x1]
        %v238 = vmul.f32 %v223, %v236
        %v239 = vsub.f32 %v237, %v238
        %v241 = vlaneseq
        %v242 = vshrl.u32 %v241, 7
        %v243 = vsub.s32 0, %v242
        %v244 = vrot.slane %v236, %v243
        %v246 = vmul.f32 %v216, %v244
        %v248 = vlaneseq
        %v249 = vshrl.u32 %v248, 7
        %v250 = vsub.s32 0, %v249
        %v251 = vrot.slane %v239, %v250
        %v253 = vadd.f32 %v246, %v251
        %254 = vst [vmem:[%s209] sm:$0xff] %v253
        %s255 = sand.u32 %s108, 1
        %s256 = scalar_lea.sflag [#allocation6], %s255
        %s257 = sand.u32 %s108, 1
        %s258 = smul.addr %s257, 8
        %s259 = scalar_lea.vmem [#allocation7], %s258
        // Predicated region
        $region37: #{tpu_custom_call.1} parent=31 // pred_check
          %p260 = pneg %p118
        $region38: #{tpu_custom_call.1} parent=31 // pred_check_branch
          %262 = sbr.rel (%p260) target = $region40
        $region39: #{tpu_custom_call.1} parent=31 // pred_region
          %s264 = ssub.s32 128, 128
          %265 = vsyncadd %s256, %s264
          %s266 = smul.addr %s22, 128
          %s267 = scalar_lea.hbm %s4, %s266
          %s269 = sshll.u32 %s259, 4
          %s270 = int_to_ptr.vmem [resolvable:$true] %s269
          %272 = dma.vmem_to_hbm [thread:$0]  %s270, 128, %s267, %s256
        $region40: #{tpu_custom_call.1} parent=31 // pred_fallthru
          _
      $region32: #{tpu_custom_call.1} parent=5 // pred_fallthru
        _
      %p273 = scmp.le.s32.totalorder 2, %s17
      // Predicated region
      $region41: #{tpu_custom_call.1} parent=5 // pred_check
        %p274 = pneg %p273
      $region42: #{tpu_custom_call.1} parent=5 // pred_check_branch
        %276 = sbr.rel (%p274) target = $region44
      $region43: #{tpu_custom_call.1} parent=5 // pred_region
        %s277 = ssub.s32 %s17, 2
        // Predicated region
        $region45: #{tpu_custom_call.1} parent=43 // pred_check
          %p278 = pneg %p124
        $region46: #{tpu_custom_call.1} parent=43 // pred_check_branch
          %280 = sbr.rel (%p278) target = $region48
        $region47: #{tpu_custom_call.1} parent=43 // pred_region
          %s281 = sand.u32 %s109, 1
          %s282 = scalar_lea.sflag [#allocation6], %s281
          %s283 = sand.u32 %s109, 1
          %s284 = smul.addr %s283, 8
          %s285 = scalar_lea.vmem [#allocation7], %s284
          %286 = dma.done %s282, 128
        $region48: #{tpu_custom_call.1} parent=43 // pred_fallthru
          _
      $region44: #{tpu_custom_call.1} parent=5 // pred_fallthru
        _
    $region6: #{tpu_custom_call.1} parent=1 // loop_footer
      %s21 = sadd.s32 1, %s17
    $region7: #{tpu_custom_call.1} parent=1 // loop_footer_branch
      %16 = sbr.rel target = $region3
    $region8: #{tpu_custom_call.1} parent=1 // loop_exit
      _
    %287 = vsyncpa [#allocation5], 1
    %s288 = scalar_lea.sflag [#allocation5], 1
    %289 = vsyncpa %s288, 1
    %290 = vsyncpa [#allocation6], 1
    %s291 = scalar_lea.sflag [#allocation6], 1
    %292 = vsyncpa %s291, 1

</llo_original>
